<compile_context>
chip_gen: v7x
topology: tpu7x:2x2x1
jax: 0.10.0
libtpu: 0.0.40
codegen_flags: <defaults>
</compile_context>

<pallas_src>
import functools

import jax
import jax.numpy as jnp
from jax.experimental import pallas as pl
from jax.experimental.pallas import tpu as pltpu

_OUT_SUB, _OUT_LANE = 8, 128  # (8,128)-aligned per-core partial-sum block


def _adaptive_weighted(err, adaptive_loss, gamma, c):
    """w * err with w = 1/(err+c)^(1-gamma); EUP-friendly special cases."""
    if not adaptive_loss:
        return err
    cf = jnp.float32(c)
    g = float(gamma)
    if g == 0.0:
        return err / (err + cf)               # exact divide (tolerance-critical)
    if g == 1.0:
        return err
    if g == 0.5:
        return err * jax.lax.rsqrt(err + cf)  # 1 EUP op instead of exp+log
    return err * jnp.exp(jnp.float32(g - 1.0) * jnp.log(err + cf))


def _meanflow_kernel(pred_ref, tgt_ref, *rest, loss_type, adaptive_loss,
                     gamma, c, rows_valid, blocks_per_core):
    if len(rest) == 3:
        mask_ref, out_ref, acc_ref = rest
    else:
        mask_ref = None
        out_ref, acc_ref = rest

    p = pl.program_id(0)   # core-split axis ("parallel")
    i = pl.program_id(1)   # reduction axis  ("arbitrary")

    @pl.when(i == 0)
    def _init():
        acc_ref[...] = jnp.zeros_like(acc_ref)

    br, cw = pred_ref.shape        # wrapper guarantees br % 8 == 0

    diff = pred_ref[...].astype(jnp.float32) - tgt_ref[...].astype(jnp.float32)
    if mask_ref is not None:       # widen the narrow mask in-kernel
        diff = diff * mask_ref[...].astype(jnp.float32)

    if loss_type == "l1":
        err = jnp.abs(diff)
    elif loss_type == "l2":
        err = diff * diff
    else:
        raise NotImplementedError(loss_type)

    def _accumulate(e):
        w = _adaptive_weighted(e, adaptive_loss, gamma, c)
        # (br, cw) -> (br//8, 8, cw) is a free sublane-group split; the
        # leading-axis sum is pure VPU vadds, so the resident accumulator is a
        # single (8, cw) f32 slab instead of a full input-sized tile.
        acc_ref[...] += jnp.sum(w.reshape(br // 8, 8, cw), axis=0)

    blk = p * blocks_per_core + i            # unclamped logical block id
    row_edge = (blk + 1) * br > rows_valid   # tail block / clamped duplicate

    @pl.when(jnp.logical_not(row_edge))
    def _interior():                         # steady state: no iota masking
        _accumulate(err)

    @pl.when(row_edge)
    def _edge():                             # zero rows past the logical end
        row_ids = blk * br + jax.lax.broadcasted_iota(jnp.int32, (br, cw), 0)
        _accumulate(jnp.where(row_ids < rows_valid, err, jnp.float32(0.0)))

    @pl.when(i == blocks_per_core - 1)
    def _finalize():
        s = jnp.sum(acc_ref[...])            # single small XLU reduce per core
        out_ref[...] = jnp.zeros(out_ref.shape, jnp.float32) + s


def _jnp_fallback(u_pred, u_tgt, mask_bmt, loss_type, adaptive_loss, gamma, c):
    """Exact pure-jnp path for tiny inputs (kernel tiling would not pay off)."""
    x = u_pred.astype(jnp.float32).reshape(-1)
    y = u_tgt.astype(jnp.float32).reshape(-1)
    d = x - y
    if mask_bmt is not None:
        d = d * mask_bmt.astype(jnp.float32).reshape(-1)
    err = jnp.abs(d) if loss_type == "l1" else d * d
    if adaptive_loss:
        err = err / jnp.power(err + jnp.float32(c), jnp.float32(1.0 - gamma))
    return jnp.mean(err)


def meanflow_loss(u_pred, u_tgt, t=None, non_padding=None, *,
                  loss_type="l2", adaptive_loss=True, gamma=0.0, c=0.001,
                  block_rows=None, core_splits=None):
    """u_pred/u_tgt: [B, 1, M, T]; t: [B] (unused, log_norm forced False in the
    PyTorch __init__); non_padding: [B, T, M] or None. Returns a f32 scalar.
    core_splits=2 lets v7x's two TensorCores each stream half the blocks."""
    del t
    if loss_type not in ("l1", "l2"):
        raise NotImplementedError(loss_type)
    B, one, M, T = u_pred.shape
    assert one == 1
    n_true = B * M * T

    # --- mask: keep the caller's narrow dtype; single 1-byte/elem reorder. ---
    mask = None
    if non_padding is not None:
        m = non_padding
        if m.dtype == jnp.bool_:
            m = m.astype(jnp.int8)     # stream 1 B/elem, widen in-kernel
        # [B, T, M] -> [B, M, T] so the mask matches u_pred's element order.
        # TODO(synk): fold this reorder into the kernel (per-(B, M, T)-tile grid
        # + in-kernel transpose) to remove this last extra HBM pass over the mask.
        mask = jnp.transpose(m, (0, 2, 1))

    # --- free (no-copy) 2-D views of the element stream ----------------------
    C = next((w for w in (512, 384, 256, 128) if n_true % w == 0), None)
    if C is not None:                  # lane-dense flat slab
        rows = n_true // C
    else:                              # natural (B*M, T) view: no pad / no slice copy
        C, rows = T, B * M
    pred2d = u_pred.reshape(rows, C)
    tgt2d = u_tgt.reshape(rows, C)
    inputs = [pred2d, tgt2d]
    if mask is not None:
        inputs.append(mask.reshape(rows, C))

    itemsizes = [jnp.dtype(a.dtype).itemsize for a in inputs]
    # Sublane alignment of the packed-dtype tile: 8 (f32) / 16 (bf16) / 32 (int8).
    align = 8 * max(1, 4 // min(itemsizes))
    bytes_per_row = C * sum(itemsizes)

    # Tiny inputs (or an absurdly long non-128-divisible T): a small exact jnp
    # reduction is cheaper than satisfying the kernel's tiling constraints.
    if rows < align or 2 * align * bytes_per_row > (24 << 20):
        # TODO(synk): add a lane-tiled kernel path for huge non-128-divisible T.
        return _jnp_fallback(u_pred, u_tgt, mask, loss_type, adaptive_loss,
                             gamma, c)

    # --- tiling ---------------------------------------------------------------
    if block_rows is None:
        # ~10 MiB of double-buffered input tiles (~2-3 MiB per input): well into
        # >=85%-of-roofline territory while fitting the default scoped-VMEM
        # limit on every generation (v5e 16 MiB, v6e/v7x 32 MiB).
        block_rows = (10 << 20) // (2 * bytes_per_row)
    block_rows = min(block_rows, rows)
    block_rows = max(align, (block_rows // align) * align)

    total_blocks = -(-rows // block_rows)            # cdiv; no row padding
    if core_splits is None:
        core_splits = 1   # TODO(synk): auto-detect v7x (2 TensorCores) and use 2.
    n_cores = max(1, min(core_splits, total_blocks))
    blocks_per_core = -(-total_blocks // n_cores)

    if n_cores * blocks_per_core > total_blocks:
        def _in_map(p, i):
            # Over-partitioned (p, i) re-fetch the last valid block; their
            # contribution is zeroed in-kernel via row masking.
            return (jnp.minimum(p * blocks_per_core + i, total_blocks - 1), 0)
    else:
        def _in_map(p, i):
            return (p * blocks_per_core + i, 0)

    tile_spec = pl.BlockSpec((block_rows, C), _in_map)

    # The default tiling fits the default scoped-VMEM limit; only raise it when
    # the caller forces larger tiles, with a generation-aware cap (v7x: 64 MiB
    # physical VMEM, so never hard-code near-physical limits).
    est = 2 * block_rows * bytes_per_row
    est += _OUT_SUB * C * 4 + 2 * n_cores * _OUT_SUB * _OUT_LANE * 4
    vmem_limit = None
    if est > (12 << 20):
        cap = 48 << 20
        try:
            cap = max(cap, pltpu.get_tpu_info().vmem_capacity_bytes - (16 << 20))
        except Exception:
            pass   # best-effort query; keep the conservative cap
        vmem_limit = min(est * 3 // 2 + (4 << 20), cap)

    kernel = functools.partial(
        _meanflow_kernel,
        loss_type=loss_type,
        adaptive_loss=adaptive_loss,
        gamma=float(gamma),
        c=float(c),
        rows_valid=rows,
        blocks_per_core=blocks_per_core,
    )

    out = pl.pallas_call(
        kernel,
        out_shape=jax.ShapeDtypeStruct((n_cores, _OUT_SUB, _OUT_LANE),
                                       jnp.float32),
        grid_spec=pltpu.PrefetchScalarGridSpec(
            num_scalar_prefetch=0,
            grid=(n_cores, blocks_per_core),
            in_specs=[tile_spec] * len(inputs),
            out_specs=pl.BlockSpec((1, _OUT_SUB, _OUT_LANE),
                                   lambda p, i: (p, 0, 0)),
            scratch_shapes=[pltpu.VMEM((_OUT_SUB, C), jnp.float32)],
        ),
        compiler_params=pltpu.CompilerParams(
            dimension_semantics=("parallel", "arbitrary"),
            vmem_limit_bytes=vmem_limit),
    )(*inputs)

    # torch .mean() divides by the un-masked element count B*M*T.
    return jnp.sum(out[:, 0, 0]) / jnp.float32(n_true)


def _reference(u_pred, u_tgt, non_padding, *, loss_type, adaptive_loss,
               gamma, c):
    u_pred = u_pred.astype(jnp.float32)
    u_tgt = u_tgt.astype(jnp.float32)
    if non_padding is not None:
        m = jnp.transpose(non_padding.astype(jnp.float32), (0, 2, 1))[:, None]
        u_pred = u_pred * m
        u_tgt = u_tgt * m
    diff = u_pred - u_tgt
    err = jnp.abs(diff) if loss_type == "l1" else diff * diff
    if adaptive_loss:
        w = 1.0 / jnp.power(err + c, 1.0 - gamma)
        err = w * err
    return jnp.mean(err)


if __name__ == "__main__":
    key = jax.random.PRNGKey(0)
    ks = jax.random.split(key, 10)

    # Case 1: f32, bool mask (streamed as int8), l2, gamma=0 exact-divide path,
    # lane-dense flat view (C=512), single block.
    B, M, T = 2, 64, 128
    u_pred = jax.random.normal(ks[0], (B, 1, M, T), jnp.float32)
    u_tgt = jax.random.normal(ks[1], (B, 1, M, T), jnp.float32)
    t = jax.random.uniform(ks[2], (B,), jnp.float32)
    non_padding = jax.random.uniform(ks[3], (B, T, M)) > 0.2       # bool

    loss = meanflow_loss(u_pred, u_tgt, t, non_padding, loss_type="l2",
                         adaptive_loss=True, gamma=0.0, c=0.001)
    jax.block_until_ready(loss)
    ref = _reference(u_pred, u_tgt, non_padding, loss_type="l2",
                     adaptive_loss=True, gamma=0.0, c=0.001)
    assert jnp.allclose(loss, ref, rtol=1e-5, atol=1e-6), (float(loss), float(ref))

    # Case 2: bf16 inputs in native dtype, no mask (2-input kernel), l1,
    # generic-gamma exp/log path, multi-block cdiv grid with edge-row masking.
    B2, M2, T2 = 2, 80, 100
    up2 = jax.random.normal(ks[4], (B2, 1, M2, T2), jnp.float32).astype(jnp.bfloat16)
    ut2 = jax.random.normal(ks[5], (B2, 1, M2, T2), jnp.float32).astype(jnp.bfloat16)
    loss2 = meanflow_loss(up2, ut2, None, None, loss_type="l1",
                          adaptive_loss=True, gamma=0.25, c=0.001)
    jax.block_until_ready(loss2)
    ref2 = _reference(up2, ut2, None, loss_type="l1", adaptive_loss=True,
                      gamma=0.25, c=0.001)
    assert jnp.allclose(loss2, ref2, rtol=1e-4, atol=1e-6), (float(loss2), float(ref2))

    # Case 3: non-128-divisible N -> free (B*M, T) view (no pad / no slice copy),
    # int8 mask, gamma=0.5 rsqrt path, core-split axis + edge masking.
    B3, M3, T3 = 3, 80, 77
    up3 = jax.random.normal(ks[6], (B3, 1, M3, T3), jnp.float32)
    ut3 = jax.random.normal(ks[7], (B3, 1, M3, T3), jnp.float32)
    np3 = (jax.random.uniform(ks[8], (B3, T3, M3)) > 0.3).astype(jnp.int8)
    loss3 = meanflow_loss(up3, ut3, None, np3, loss_type="l2",
                          adaptive_loss=True, gamma=0.5, c=0.001, core_splits=2)
    jax.block_until_ready(loss3)
    ref3 = _reference(up3, ut3, np3, loss_type="l2", adaptive_loss=True,
                      gamma=0.5, c=0.001)
    assert jnp.allclose(loss3, ref3, rtol=1e-4, atol=1e-6), (float(loss3), float(ref3))

    # Case 4: adaptive_loss=False with a float mask streamed in native f32.
    loss4 = meanflow_loss(u_pred, u_tgt, t, non_padding.astype(jnp.float32),
                          loss_type="l2", adaptive_loss=False)
    jax.block_until_ready(loss4)
    ref4 = _reference(u_pred, u_tgt, non_padding, loss_type="l2",
                      adaptive_loss=False, gamma=0.0, c=0.001)
    assert jnp.allclose(loss4, ref4, rtol=1e-5, atol=1e-6), (float(loss4), float(ref4))

    # Case 5: tiny input exercises the exact pure-jnp fallback path.
    up5 = jax.random.normal(ks[9], (1, 1, 4, 4), jnp.float32)
    loss5 = meanflow_loss(up5, -up5, None, None, loss_type="l2", gamma=0.0)
    jax.block_until_ready(loss5)
    ref5 = _reference(up5, -up5, None, loss_type="l2", adaptive_loss=True,
                      gamma=0.0, c=0.001)
    assert jnp.allclose(loss5, ref5, rtol=1e-5, atol=1e-6), (float(loss5), float(ref5))

    print("KERNEL_OK")
</pallas_src>

<mosaic_0001>
module attributes {stable_mosaic.version = 11 : i64} {
  func.func @_meanflow_kernel(%arg0: i32, %arg1: i32, %arg2: memref<32x512xf32, #tpu.memory_space<vmem>>, %arg3: memref<32x512xf32, #tpu.memory_space<vmem>>, %arg4: memref<32x512xi8, #tpu.memory_space<vmem>>, %arg5: memref<1x8x128xf32, #tpu.memory_space<vmem>>, %arg6: memref<8x512xf32, #tpu.memory_space<vmem>>) attributes {dimension_semantics = [#tpu.dimension_semantics<parallel>, #tpu.dimension_semantics<arbitrary>], iteration_bounds = array<i64: 1, 1>, scalar_prefetch = 0 : i64, scratch_operands = 1 : i64, tpu.core_type = #tpu.core_type<tc>, window_params = [{transform_indices = @transform_0, window_bounds = array<i64: 32, 512>}, {transform_indices = @transform_1, window_bounds = array<i64: 32, 512>}, {transform_indices = @transform_2, window_bounds = array<i64: 32, 512>}, {transform_indices = @transform_3, window_bounds = array<i64: 1, 8, 128>}]} {
    %c0_i32 = arith.constant 0 : i32
    %0 = arith.cmpi eq, %arg1, %c0_i32 : i32
    %1 = arith.extui %0 : i1 to i32
    %c0_i32_0 = arith.constant 0 : i32
    %2 = arith.cmpi ne, %1, %c0_i32_0 : i32
    scf.if %2 {
      %cst = arith.constant 0.000000e+00 : f32
      %23 = vector.broadcast %cst : f32 to vector<8x512xf32>
      %c0_12 = arith.constant 0 : index
      %c0_13 = arith.constant 0 : index
      %24 = vector.load %arg6[%c0_12, %c0_13] : memref<8x512xf32, #tpu.memory_space<vmem>>, vector<8x512xf32>
      tpu.vector_store %arg6[%c0_12, %c0_13], %23 {strides = array<i32>} : memref<8x512xf32, #tpu.memory_space<vmem>>, vector<8x512xf32>,
    } else {
    }
    %c0 = arith.constant 0 : index
    %c0_1 = arith.constant 0 : index
    %3 = vector.load %arg2[%c0, %c0_1] : memref<32x512xf32, #tpu.memory_space<vmem>>, vector<32x512xf32>
    %c0_2 = arith.constant 0 : index
    %c0_3 = arith.constant 0 : index
    %4 = vector.load %arg3[%c0_2, %c0_3] : memref<32x512xf32, #tpu.memory_space<vmem>>, vector<32x512xf32>
    %5 = arith.subf %3, %4 : vector<32x512xf32>
    %c0_4 = arith.constant 0 : index
    %c0_5 = arith.constant 0 : index
    %6 = vector.load %arg4[%c0_4, %c0_5] : memref<32x512xi8, #tpu.memory_space<vmem>>, vector<32x512xi8>
    %7 = arith.sitofp %6 : vector<32x512xi8> to vector<32x512xf32>
    %8 = arith.mulf %5, %7 : vector<32x512xf32>
    %9 = arith.mulf %8, %8 : vector<32x512xf32>
    %c1_i32 = arith.constant 1 : i32
    %10 = arith.muli %arg0, %c1_i32 : i32
    %11 = arith.addi %10, %arg1 : i32
    %c1_i32_6 = arith.constant 1 : i32
    %12 = arith.addi %11, %c1_i32_6 : i32
    %c32_i32 = arith.constant 32 : i32
    %13 = arith.muli %12, %c32_i32 : i32
    %c32_i32_7 = arith.constant 32 : i32
    %14 = arith.cmpi sgt, %13, %c32_i32_7 : i32
    %true = arith.constant true
    %15 = arith.xori %14, %true : i1
    %16 = arith.extui %15 : i1 to i32
    %c0_i32_8 = arith.constant 0 : i32
    %17 = arith.cmpi ne, %16, %c0_i32_8 : i32
    scf.if %17 {
      %cst = arith.constant 1.000000e-03 : f32
      %23 = vector.broadcast %cst : f32 to vector<32x512xf32>
      %24 = arith.addf %9, %23 : vector<32x512xf32>
      %25 = arith.divf %9, %24 : vector<32x512xf32>
      %c0_12 = arith.constant 0 : index
      %c0_13 = arith.constant 0 : index
      %26 = vector.load %arg6[%c0_12, %c0_13] : memref<8x512xf32, #tpu.memory_space<vmem>>, vector<8x512xf32>
      %27 = vector.shape_cast %25 : vector<32x512xf32> to vector<4x8x512xf32>
      %cst_14 = arith.constant dense<0.000000e+00> : vector<8x512xf32>
      %28 = vector.multi_reduction <add>, %27, %cst_14 [0] : vector<4x8x512xf32> to vector<8x512xf32>
      %29 = arith.addf %26, %28 : vector<8x512xf32>
      %c0_15 = arith.constant 0 : index
      %c0_16 = arith.constant 0 : index
      %30 = vector.load %arg6[%c0_15, %c0_16] : memref<8x512xf32, #tpu.memory_space<vmem>>, vector<8x512xf32>
      tpu.vector_store %arg6[%c0_15, %c0_16], %29 {strides = array<i32>} : memref<8x512xf32, #tpu.memory_space<vmem>>, vector<8x512xf32>,
    } else {
    }
    %18 = arith.extui %14 : i1 to i32
    %c0_i32_9 = arith.constant 0 : i32
    %19 = arith.cmpi ne, %18, %c0_i32_9 : i32
    scf.if %19 {
      %c32_i32_12 = arith.constant 32 : i32
      %23 = arith.muli %11, %c32_i32_12 : i32
      %24 = tpu.iota {dimensions = array<i32: 0>} : vector<32x512xi32>
      %25 = vector.broadcast %23 : i32 to vector<32x512xi32>
      %26 = arith.addi %25, %24 : vector<32x512xi32>
      %c32_i32_13 = arith.constant 32 : i32
      %27 = vector.broadcast %c32_i32_13 : i32 to vector<32x512xi32>
      %28 = arith.cmpi slt, %26, %27 : vector<32x512xi32>
      %cst = arith.constant 0.000000e+00 : f32
      %29 = vector.broadcast %cst : f32 to vector<32x512xf32>
      %30 = arith.select %28, %9, %29 : vector<32x512xi1>, vector<32x512xf32>
      %cst_14 = arith.constant 1.000000e-03 : f32
      %31 = vector.broadcast %cst_14 : f32 to vector<32x512xf32>
      %32 = arith.addf %30, %31 : vector<32x512xf32>
      %33 = arith.divf %30, %32 : vector<32x512xf32>
      %c0_15 = arith.constant 0 : index
      %c0_16 = arith.constant 0 : index
      %34 = vector.load %arg6[%c0_15, %c0_16] : memref<8x512xf32, #tpu.memory_space<vmem>>, vector<8x512xf32>
      %35 = vector.shape_cast %33 : vector<32x512xf32> to vector<4x8x512xf32>
      %cst_17 = arith.constant dense<0.000000e+00> : vector<8x512xf32>
      %36 = vector.multi_reduction <add>, %35, %cst_17 [0] : vector<4x8x512xf32> to vector<8x512xf32>
      %37 = arith.addf %34, %36 : vector<8x512xf32>
      %c0_18 = arith.constant 0 : index
      %c0_19 = arith.constant 0 : index
      %38 = vector.load %arg6[%c0_18, %c0_19] : memref<8x512xf32, #tpu.memory_space<vmem>>, vector<8x512xf32>
      tpu.vector_store %arg6[%c0_18, %c0_19], %37 {strides = array<i32>} : memref<8x512xf32, #tpu.memory_space<vmem>>, vector<8x512xf32>,
    } else {
    }
    %c0_i32_10 = arith.constant 0 : i32
    %20 = arith.cmpi eq, %arg1, %c0_i32_10 : i32
    %21 = arith.extui %20 : i1 to i32
    %c0_i32_11 = arith.constant 0 : i32
    %22 = arith.cmpi ne, %21, %c0_i32_11 : i32
    scf.if %22 {
      %c0_12 = arith.constant 0 : index
      %c0_13 = arith.constant 0 : index
      %23 = vector.load %arg6[%c0_12, %c0_13] : memref<8x512xf32, #tpu.memory_space<vmem>>, vector<8x512xf32>
      %24 = vector.shape_cast %23 : vector<8x512xf32> to vector<1x8x512xf32>
      %cst = arith.constant dense<0.000000e+00> : vector<1xf32>
      %25 = vector.multi_reduction <add>, %24, %cst [1, 2] : vector<1x8x512xf32> to vector<1xf32>
      %26 = vector.shape_cast %25 : vector<1xf32> to vector<1x1x1xf32>
      %27 = vector.extract %26[0, 0, 0] : f32 from vector<1x1x1xf32>
      %cst_14 = arith.constant 0.000000e+00 : f32
      %28 = vector.broadcast %cst_14 : f32 to vector<1x8x128xf32>
      %29 = vector.broadcast %27 : f32 to vector<1x8x128xf32>
      %30 = arith.addf %28, %29 : vector<1x8x128xf32>
      %c0_15 = arith.constant 0 : index
      %c0_16 = arith.constant 0 : index
      %c0_17 = arith.constant 0 : index
      %31 = vector.load %arg5[%c0_15, %c0_16, %c0_17] : memref<1x8x128xf32, #tpu.memory_space<vmem>>, vector<1x8x128xf32>
      tpu.vector_store %arg5[%c0_15, %c0_16, %c0_17], %30 {strides = array<i32>} : memref<1x8x128xf32, #tpu.memory_space<vmem>>, vector<1x8x128xf32>,
    } else {
    }
    return
  }
  func.func @transform_0(%arg0: i32, %arg1: i32) -> (i32, i32) {
    %c1_i32 = arith.constant 1 : i32
    %0 = arith.muli %arg0, %c1_i32 : i32
    %1 = arith.addi %0, %arg1 : i32
    %c0_i32 = arith.constant 0 : i32
    %c0_i32_0 = arith.constant 0 : i32
    return %1, %c0_i32 : i32, i32
  }
  func.func @transform_1(%arg0: i32, %arg1: i32) -> (i32, i32) {
    %c1_i32 = arith.constant 1 : i32
    %0 = arith.muli %arg0, %c1_i32 : i32
    %1 = arith.addi %0, %arg1 : i32
    %c0_i32 = arith.constant 0 : i32
    %c0_i32_0 = arith.constant 0 : i32
    return %1, %c0_i32 : i32, i32
  }
  func.func @transform_2(%arg0: i32, %arg1: i32) -> (i32, i32) {
    %c1_i32 = arith.constant 1 : i32
    %0 = arith.muli %arg0, %c1_i32 : i32
    %1 = arith.addi %0, %arg1 : i32
    %c0_i32 = arith.constant 0 : i32
    %c0_i32_0 = arith.constant 0 : i32
    return %1, %c0_i32 : i32, i32
  }
  func.func @transform_3(%arg0: i32, %arg1: i32) -> (i32, i32, i32) {
    %c0_i32 = arith.constant 0 : i32
    %c0_i32_0 = arith.constant 0 : i32
    %c0_i32_1 = arith.constant 0 : i32
    return %arg0, %c0_i32, %c0_i32_0 : i32, i32, i32
  }
}

</mosaic_0001>

<llo_original>
// kernel: tpu_custom_call.1
$region0: #{tpu_custom_call.1}
  #allocation0 [shape = 'u32[]', space=smem, size = 0x4, offset = 0x4, fixed_abs, tag = 'smem constant byte address 0x4 - core index']
  #allocation1 [shape = 'u32[144,128]{1,0:T(1,128)}', space=vmem, size = 0x12000, scoped, tag = 'internal scratch']
  #allocation2 [shape = 'f32[8,512]{1,0:T(8,128)}', space=vmem, size = 0x4000, scoped, tag = 'scratch operand']
  %s0 = inlined_call_operand.hbm [shape: f32[32,512], index: 0, kind: input, shape index: {}]
  %s1 = inlined_call_operand.hbm [shape: f32[32,512], index: 1, kind: input, shape index: {}]
  %s2 = inlined_call_operand.hbm [shape: s8[32,512], index: 2, kind: input, shape index: {}]
  %s3 = inlined_call_operand.hbm [shape: f32[1,8,128], index: 3, kind: output, shape index: {}]
  %s4 = sld [smem:[#allocation0]]
  $region50: #{tpu_custom_call.1} parent=0
    _
  %s6 = ssub.s32 1, %s4
  %s7 = scalar_select 0, %s6, %s4
  $region1: #{tpu_custom_call.1} parent=0
    #allocation3 [shape = 'u8[65536]{0}', space=vmem, size = 0x10000, scoped, tag = 'input window, operand 0, single buffered']
    #allocation4 [shape = 's32[1]{0}', space=sflag, size = 0x4, scoped, tag = 'scoped memory for tpu_custom_call.1']
    #allocation5 [shape = 's32[1]{0}', space=sflag, size = 0x4, scoped, tag = 'scoped memory for tpu_custom_call.1']
    #allocation6 [shape = 'u8[65536]{0}', space=vmem, size = 0x10000, scoped, tag = 'input window, operand 1, single buffered']
    #allocation7 [shape = 's32[1]{0}', space=sflag, size = 0x4, scoped, tag = 'scoped memory for tpu_custom_call.1']
    #allocation8 [shape = 'u8[16384]{0}', space=vmem, size = 0x4000, scoped, tag = 'input window, operand 2, single buffered']
    #allocation9 [shape = 'u8[4096]{0}', space=vmem, size = 0x1000, scoped, tag = 'output window, operand 0, single buffered']
    %8 = vsyncpa [#allocation4], 0
    %9 = vsyncpa [#allocation7], 0
    %10 = vsyncpa [#allocation5], 0
    // Predicated region
    $region2: #{tpu_custom_call.1} parent=1 // pred_check
      _
    $region3: #{tpu_custom_call.1} parent=1 // pred_check_branch
      %12 = sbr.rel (0) target = $region5
    $region4: #{tpu_custom_call.1} parent=1 // pred_region
      %s13 = sadd.s32 0, 0
      %s14 = smul.u32 4, %s13
      %s16 = ssub.s32 2048, 2048
      %17 = vsyncadd [#allocation4], %s16
      %s18 = smul.addr %s14, 4
      %s19 = smul.addr %s18, 128
      %s20 = scalar_lea.hbm %s0, %s19
      %s21 = sshll.u32 [#allocation3], 4
      %s22 = int_to_ptr.vmem [resolvable:$true] %s21
      %27 = dma.hbm_to_vmem [thread:$0]  %s20, 2048, %s22, [#allocation4], 512, 512, 32
    $region5: #{tpu_custom_call.1} parent=1 // pred_fallthru
      _
    // Predicated region
    $region6: #{tpu_custom_call.1} parent=1 // pred_check
      _
    $region7: #{tpu_custom_call.1} parent=1 // pred_check_branch
      %29 = sbr.rel (0) target = $region9
    $region8: #{tpu_custom_call.1} parent=1 // pred_region
      %s30 = sadd.s32 0, 0
      %s31 = smul.u32 4, %s30
      %s33 = ssub.s32 2048, 2048
      %34 = vsyncadd [#allocation7], %s33
      %s35 = smul.addr %s31, 4
      %s36 = smul.addr %s35, 128
      %s37 = scalar_lea.hbm %s1, %s36
      %s38 = sshll.u32 [#allocation6], 4
      %s39 = int_to_ptr.vmem [resolvable:$true] %s38
      %44 = dma.hbm_to_vmem [thread:$0]  %s37, 2048, %s39, [#allocation7], 512, 512, 32
    $region9: #{tpu_custom_call.1} parent=1 // pred_fallthru
      _
    // Predicated region
    $region10: #{tpu_custom_call.1} parent=1 // pred_check
      _
    $region11: #{tpu_custom_call.1} parent=1 // pred_check_branch
      %46 = sbr.rel (0) target = $region13
    $region12: #{tpu_custom_call.1} parent=1 // pred_region
      %s47 = sadd.s32 0, 0
      %s49 = ssub.s32 512, 512
      %50 = vsyncadd [#allocation7], %s49
      %s51 = smul.addr %s47, 4
      %s52 = smul.addr %s51, 128
      %s53 = scalar_lea.hbm %s2, %s52
      %s55 = sshll.u32 [#allocation8], 4
      %s56 = int_to_ptr.vmem [resolvable:$true] %s55
      %58 = dma.hbm_to_vmem [thread:$0]  %s53, 512, %s56, [#allocation7]
    $region13: #{tpu_custom_call.1} parent=1 // pred_fallthru
      _
    // Predicated region
    $region14: #{tpu_custom_call.1} parent=1 // pred_check
      _
    $region15: #{tpu_custom_call.1} parent=1 // pred_check_branch
      %60 = sbr.rel (0) target = $region17
    $region16: #{tpu_custom_call.1} parent=1 // pred_region
      %61 = dma.done [#allocation4], 2048
    $region17: #{tpu_custom_call.1} parent=1 // pred_fallthru
      _
    // Predicated region
    $region18: #{tpu_custom_call.1} parent=1 // pred_check
      _
    $region19: #{tpu_custom_call.1} parent=1 // pred_check_branch
      %63 = sbr.rel (0) target = $region21
    $region20: #{tpu_custom_call.1} parent=1 // pred_region
      %64 = dma.done [#allocation7], 2048
    $region21: #{tpu_custom_call.1} parent=1 // pred_fallthru
      _
    // Predicated region
    $region22: #{tpu_custom_call.1} parent=1 // pred_check
      _
    $region23: #{tpu_custom_call.1} parent=1 // pred_check_branch
      %66 = sbr.rel (0) target = $region25
    $region24: #{tpu_custom_call.1} parent=1 // pred_region
      %67 = dma.done [#allocation7], 512
    $region25: #{tpu_custom_call.1} parent=1 // pred_fallthru
      _
    %s68 = sadd.s32 0, 0
    %s69 = smul.u32 4, %s68
    %s70 = sadd.s32 0, 0
    %s71 = smul.u32 4, %s70
    %s72 = sadd.s32 0, 0
    %p73 = scmp.eq.s32.totalorder 0, 0
    // Predicated region
    $region26: #{tpu_custom_call.1} parent=1 // pred_check
      %p74 = pneg %p73
    $region27: #{tpu_custom_call.1} parent=1 // pred_check_branch
      %76 = sbr.rel (%p74) target = $region29
    $region28: #{tpu_custom_call.1} parent=1 // pred_region
      %77 = vst [vmem:[#allocation2] sm:$0xff] 0.0
      %78 = vst [vmem:[#allocation2 + $0x8] sm:$0xff] 0.0
      %79 = vst [vmem:[#allocation2 + $0x10] sm:$0xff] 0.0
      %80 = vst [vmem:[#allocation2 + $0x18] sm:$0xff] 0.0
    $region29: #{tpu_custom_call.1} parent=1 // pred_fallthru
      _
    %v81 = vld [vmem:[#allocation3] sm:$0xff]
    %v82 = vld [vmem:[#allocation3 + $0x8] sm:$0xff]
    %v83 = vld [vmem:[#allocation3 + $0x10] sm:$0xff]
    %v84 = vld [vmem:[#allocation3 + $0x18] sm:$0xff]
    %v85 = vld [vmem:[#allocation3 + $0x20] sm:$0xff]
    %v86 = vld [vmem:[#allocation3 + $0x28] sm:$0xff]
    %v87 = vld [vmem:[#allocation3 + $0x30] sm:$0xff]
    %v88 = vld [vmem:[#allocation3 + $0x38] sm:$0xff]
    %v89 = vld [vmem:[#allocation3 + $0x40] sm:$0xff]
    %v90 = vld [vmem:[#allocation3 + $0x48] sm:$0xff]
    %v91 = vld [vmem:[#allocation3 + $0x50] sm:$0xff]
    %v92 = vld [vmem:[#allocation3 + $0x58] sm:$0xff]
    %v93 = vld [vmem:[#allocation3 + $0x60] sm:$0xff]
    %v94 = vld [vmem:[#allocation3 + $0x68] sm:$0xff]
    %v95 = vld [vmem:[#allocation3 + $0x70] sm:$0xff]
    %v96 = vld [vmem:[#allocation3 + $0x78] sm:$0xff]
    %v97 = vld [vmem:[#allocation6] sm:$0xff]
    %v98 = vld [vmem:[#allocation6 + $0x8] sm:$0xff]
    %v99 = vld [vmem:[#allocation6 + $0x10] sm:$0xff]
    %v100 = vld [vmem:[#allocation6 + $0x18] sm:$0xff]
    %v101 = vld [vmem:[#allocation6 + $0x20] sm:$0xff]
    %v102 = vld [vmem:[#allocation6 + $0x28] sm:$0xff]
    %v103 = vld [vmem:[#allocation6 + $0x30] sm:$0xff]
    %v104 = vld [vmem:[#allocation6 + $0x38] sm:$0xff]
    %v105 = vld [vmem:[#allocation6 + $0x40] sm:$0xff]
    %v106 = vld [vmem:[#allocation6 + $0x48] sm:$0xff]
    %v107 = vld [vmem:[#allocation6 + $0x50] sm:$0xff]
    %v108 = vld [vmem:[#allocation6 + $0x58] sm:$0xff]
    %v109 = vld [vmem:[#allocation6 + $0x60] sm:$0xff]
    %v110 = vld [vmem:[#allocation6 + $0x68] sm:$0xff]
    %v111 = vld [vmem:[#allocation6 + $0x70] sm:$0xff]
    %v112 = vld [vmem:[#allocation6 + $0x78] sm:$0xff]
    %v113 = vsub.f32 %v81, %v97
    %v114 = vsub.f32 %v82, %v98
    %v115 = vsub.f32 %v83, %v99
    %v116 = vsub.f32 %v84, %v100
    %v117 = vsub.f32 %v85, %v101
    %v118 = vsub.f32 %v86, %v102
    %v119 = vsub.f32 %v87, %v103
    %v120 = vsub.f32 %v88, %v104
    %v121 = vsub.f32 %v89, %v105
    %v122 = vsub.f32 %v90, %v106
    %v123 = vsub.f32 %v91, %v107
    %v124 = vsub.f32 %v92, %v108
    %v125 = vsub.f32 %v93, %v109
    %v126 = vsub.f32 %v94, %v110
    %v127 = vsub.f32 %v95, %v111
    %v128 = vsub.f32 %v96, %v112
    %v129 = vld [vmem:[#allocation8] sm:$0xff]
    %v130 = vld [vmem:[#allocation8 + $0x8] sm:$0xff]
    %v131 = vld [vmem:[#allocation8 + $0x10] sm:$0xff]
    %v132 = vld [vmem:[#allocation8 + $0x18] sm:$0xff]
    %v133 = vunpack.c.0.s8 %v129
    %v134 = vunpack.c.0.s8 %v130
    %v135 = vunpack.c.0.s8 %v131
    %v136 = vunpack.c.0.s8 %v132
    %v137 = vunpack.c.1.s8 %v129
    %v138 = vunpack.c.1.s8 %v130
    %v139 = vunpack.c.1.s8 %v131
    %v140 = vunpack.c.1.s8 %v132
    %v141 = vunpack.c.2.s8 %v129
    %v142 = vunpack.c.2.s8 %v130
    %v143 = vunpack.c.2.s8 %v131
    %v144 = vunpack.c.2.s8 %v132
    %v145 = vunpack.c.3.s8 %v129
    %v146 = vunpack.c.3.s8 %v130
    %v147 = vunpack.c.3.s8 %v131
    %v148 = vunpack.c.3.s8 %v132
    %v149 = vcvt.s32.f32 %v133
    %v150 = vcvt.s32.f32 %v134
    %v151 = vcvt.s32.f32 %v135
    %v152 = vcvt.s32.f32 %v136
    %v153 = vcvt.s32.f32 %v137
    %v154 = vcvt.s32.f32 %v138
    %v155 = vcvt.s32.f32 %v139
    %v156 = vcvt.s32.f32 %v140
    %v157 = vcvt.s32.f32 %v141
    %v158 = vcvt.s32.f32 %v142
    %v159 = vcvt.s32.f32 %v143
    %v160 = vcvt.s32.f32 %v144
    %v161 = vcvt.s32.f32 %v145
    %v162 = vcvt.s32.f32 %v146
    %v163 = vcvt.s32.f32 %v147
    %v164 = vcvt.s32.f32 %v148
    %v165 = vmul.f32 %v113, %v149
    %v166 = vmul.f32 %v114, %v150
    %v167 = vmul.f32 %v115, %v151
    %v168 = vmul.f32 %v116, %v152
    %v169 = vmul.f32 %v117, %v153
    %v170 = vmul.f32 %v118, %v154
    %v171 = vmul.f32 %v119, %v155
    %v172 = vmul.f32 %v120, %v156
    %v173 = vmul.f32 %v121, %v157
    %v174 = vmul.f32 %v122, %v158
    %v175 = vmul.f32 %v123, %v159
    %v176 = vmul.f32 %v124, %v160
    %v177 = vmul.f32 %v125, %v161
    %v178 = vmul.f32 %v126, %v162
    %v179 = vmul.f32 %v127, %v163
    %v180 = vmul.f32 %v128, %v164
    %v181 = vmul.f32 %v165, %v165
    %v182 = vmul.f32 %v166, %v166
    %v183 = vmul.f32 %v167, %v167
    %v184 = vmul.f32 %v168, %v168
    %v185 = vmul.f32 %v169, %v169
    %v186 = vmul.f32 %v170, %v170
    %v187 = vmul.f32 %v171, %v171
    %v188 = vmul.f32 %v172, %v172
    %v189 = vmul.f32 %v173, %v173
    %v190 = vmul.f32 %v174, %v174
    %v191 = vmul.f32 %v175, %v175
    %v192 = vmul.f32 %v176, %v176
    %v193 = vmul.f32 %v177, %v177
    %v194 = vmul.f32 %v178, %v178
    %v195 = vmul.f32 %v179, %v179
    %v196 = vmul.f32 %v180, %v180
    %s197 = sadd.s32 0, 0
    %s198 = sadd.s32 %s197, 1
    %s199 = smul.u32 %s198, 32
    %p200 = scmp.gt.s32.totalorder %s199, 32
    %p201 = scmp.le.s32.totalorder %s199, 32
    // Predicated region
    $region30: #{tpu_custom_call.1} parent=1 // pred_check
      %p202 = pneg %p201
    $region31: #{tpu_custom_call.1} parent=1 // pred_check_branch
      %204 = sbr.rel (%p202) target = $region33
    $region32: #{tpu_custom_call.1} parent=1 // pred_region
      %v205 = vadd.f32 %v181, 0.001
      %v206 = vadd.f32 %v182, 0.001
      %v207 = vadd.f32 %v183, 0.001
      %v208 = vadd.f32 %v184, 0.001
      %v209 = vadd.f32 %v185, 0.001
      %v210 = vadd.f32 %v186, 0.001
      %v211 = vadd.f32 %v187, 0.001
      %v212 = vadd.f32 %v188, 0.001
      %v213 = vadd.f32 %v189, 0.001
      %v214 = vadd.f32 %v190, 0.001
      %v215 = vadd.f32 %v191, 0.001
      %v216 = vadd.f32 %v192, 0.001
      %v217 = vadd.f32 %v193, 0.001
      %v218 = vadd.f32 %v194, 0.001
      %v219 = vadd.f32 %v195, 0.001
      %v220 = vadd.f32 %v196, 0.001
      %v221 = vrcp.pop %v205
      %v222 = vmul.f32 %v181, %v221
      %v223 = vrcp.pop %v206
      %v224 = vmul.f32 %v182, %v223
      %v225 = vrcp.pop %v207
      %v226 = vmul.f32 %v183, %v225
      %v227 = vrcp.pop %v208
      %v228 = vmul.f32 %v184, %v227
      %v229 = vrcp.pop %v209
      %v230 = vmul.f32 %v185, %v229
      %v231 = vrcp.pop %v210
      %v232 = vmul.f32 %v186, %v231
      %v233 = vrcp.pop %v211
      %v234 = vmul.f32 %v187, %v233
      %v235 = vrcp.pop %v212
      %v236 = vmul.f32 %v188, %v235
      %v237 = vrcp.pop %v213
      %v238 = vmul.f32 %v189, %v237
      %v239 = vrcp.pop %v214
      %v240 = vmul.f32 %v190, %v239
      %v241 = vrcp.pop %v215
      %v242 = vmul.f32 %v191, %v241
      %v243 = vrcp.pop %v216
      %v244 = vmul.f32 %v192, %v243
      %v245 = vrcp.pop %v217
      %v246 = vmul.f32 %v193, %v245
      %v247 = vrcp.pop %v218
      %v248 = vmul.f32 %v194, %v247
      %v249 = vrcp.pop %v219
      %v250 = vmul.f32 %v195, %v249
      %v251 = vrcp.pop %v220
      %v252 = vmul.f32 %v196, %v251
      %v253 = vld [vmem:[#allocation2] sm:$0xff]
      %v254 = vld [vmem:[#allocation2 + $0x8] sm:$0xff]
      %v255 = vld [vmem:[#allocation2 + $0x10] sm:$0xff]
      %v256 = vld [vmem:[#allocation2 + $0x18] sm:$0xff]
      %v257 = vadd.f32 %v222, %v230
      %v258 = vadd.f32 %v257, %v238
      %v259 = vadd.f32 %v258, %v246
      %v260 = vadd.f32 %v224, %v232
      %v261 = vadd.f32 %v260, %v240
      %v262 = vadd.f32 %v261, %v248
      %v263 = vadd.f32 %v226, %v234
      %v264 = vadd.f32 %v263, %v242
      %v265 = vadd.f32 %v264, %v250
      %v266 = vadd.f32 %v228, %v236
      %v267 = vadd.f32 %v266, %v244
      %v268 = vadd.f32 %v267, %v252
      %v269 = vadd.f32 %v253, %v259
      %v270 = vadd.f32 %v254, %v262
      %v271 = vadd.f32 %v255, %v265
      %v272 = vadd.f32 %v256, %v268
      %273 = vst [vmem:[#allocation2] sm:$0xff] %v269
      %274 = vst [vmem:[#allocation2 + $0x8] sm:$0xff] %v270
      %275 = vst [vmem:[#allocation2 + $0x10] sm:$0xff] %v271
      %276 = vst [vmem:[#allocation2 + $0x18] sm:$0xff] %v272
    $region33: #{tpu_custom_call.1} parent=1 // pred_fallthru
      _
    // Predicated region
    $region34: #{tpu_custom_call.1} parent=1 // pred_check
      %p277 = pneg %p200
    $region35: #{tpu_custom_call.1} parent=1 // pred_check_branch
      %279 = sbr.rel (%p277) target = $region37
    $region36: #{tpu_custom_call.1} parent=1 // pred_region
      %s280 = smul.u32 %s197, 32
      %v281 = vlaneseq
      %v282 = vshrl.u32 %v281, 7
      %v283 = vadd.s32 %v282, 8
      %v284 = vadd.s32 %v282, 16
      %v285 = vadd.s32 %v282, 24
      %v286 = vstv %s280
      %v287 = vadd.s32 %v286, %v282
      %v288 = vadd.s32 %v286, %v283
      %v289 = vadd.s32 %v286, %v284
      %v290 = vadd.s32 %v286, %v285
      %vm291 = vcmp.lt.s32.totalorder %v287, 32
      %vm292 = vcmp.lt.s32.totalorder %v288, 32
      %vm293 = vcmp.lt.s32.totalorder %v289, 32
      %vm294 = vcmp.lt.s32.totalorder %v290, 32
      %v295 = vsel %vm291, %v181, 0.0
      %v296 = vsel %vm291, %v182, 0.0
      %v297 = vsel %vm291, %v183, 0.0
      %v298 = vsel %vm291, %v184, 0.0
      %v299 = vsel %vm292, %v185, 0.0
      %v300 = vsel %vm292, %v186, 0.0
      %v301 = vsel %vm292, %v187, 0.0
      %v302 = vsel %vm292, %v188, 0.0
      %v303 = vsel %vm293, %v189, 0.0
      %v304 = vsel %vm293, %v190, 0.0
      %v305 = vsel %vm293, %v191, 0.0
      %v306 = vsel %vm293, %v192, 0.0
      %v307 = vsel %vm294, %v193, 0.0
      %v308 = vsel %vm294, %v194, 0.0
      %v309 = vsel %vm294, %v195, 0.0
      %v310 = vsel %vm294, %v196, 0.0
      %v311 = vadd.f32 %v295, 0.001
      %v312 = vadd.f32 %v296, 0.001
      %v313 = vadd.f32 %v297, 0.001
      %v314 = vadd.f32 %v298, 0.001
      %v315 = vadd.f32 %v299, 0.001
      %v316 = vadd.f32 %v300, 0.001
      %v317 = vadd.f32 %v301, 0.001
      %v318 = vadd.f32 %v302, 0.001
      %v319 = vadd.f32 %v303, 0.001
      %v320 = vadd.f32 %v304, 0.001
      %v321 = vadd.f32 %v305, 0.001
      %v322 = vadd.f32 %v306, 0.001
      %v323 = vadd.f32 %v307, 0.001
      %v324 = vadd.f32 %v308, 0.001
      %v325 = vadd.f32 %v309, 0.001
      %v326 = vadd.f32 %v310, 0.001
      %v327 = vrcp.pop %v311
      %v328 = vmul.f32 %v295, %v327
      %v329 = vrcp.pop %v312
      %v330 = vmul.f32 %v296, %v329
      %v331 = vrcp.pop %v313
      %v332 = vmul.f32 %v297, %v331
      %v333 = vrcp.pop %v314
      %v334 = vmul.f32 %v298, %v333
      %v335 = vrcp.pop %v315
      %v336 = vmul.f32 %v299, %v335
      %v337 = vrcp.pop %v316
      %v338 = vmul.f32 %v300, %v337
      %v339 = vrcp.pop %v317
      %v340 = vmul.f32 %v301, %v339
      %v341 = vrcp.pop %v318
      %v342 = vmul.f32 %v302, %v341
      %v343 = vrcp.pop %v319
      %v344 = vmul.f32 %v303, %v343
      %v345 = vrcp.pop %v320
      %v346 = vmul.f32 %v304, %v345
      %v347 = vrcp.pop %v321
      %v348 = vmul.f32 %v305, %v347
      %v349 = vrcp.pop %v322
      %v350 = vmul.f32 %v306, %v349
      %v351 = vrcp.pop %v323
      %v352 = vmul.f32 %v307, %v351
      %v353 = vrcp.pop %v324
      %v354 = vmul.f32 %v308, %v353
      %v355 = vrcp.pop %v325
      %v356 = vmul.f32 %v309, %v355
      %v357 = vrcp.pop %v326
      %v358 = vmul.f32 %v310, %v357
      %v359 = vld [vmem:[#allocation2] sm:$0xff]
      %v360 = vld [vmem:[#allocation2 + $0x8] sm:$0xff]
      %v361 = vld [vmem:[#allocation2 + $0x10] sm:$0xff]
      %v362 = vld [vmem:[#allocation2 + $0x18] sm:$0xff]
      %v363 = vadd.f32 %v328, %v336
      %v364 = vadd.f32 %v363, %v344
      %v365 = vadd.f32 %v364, %v352
      %v366 = vadd.f32 %v330, %v338
      %v367 = vadd.f32 %v366, %v346
      %v368 = vadd.f32 %v367, %v354
      %v369 = vadd.f32 %v332, %v340
      %v370 = vadd.f32 %v369, %v348
      %v371 = vadd.f32 %v370, %v356
      %v372 = vadd.f32 %v334, %v342
      %v373 = vadd.f32 %v372, %v350
      %v374 = vadd.f32 %v373, %v358
      %v375 = vadd.f32 %v359, %v365
      %v376 = vadd.f32 %v360, %v368
      %v377 = vadd.f32 %v361, %v371
      %v378 = vadd.f32 %v362, %v374
      %379 = vst [vmem:[#allocation2] sm:$0xff] %v375
      %380 = vst [vmem:[#allocation2 + $0x8] sm:$0xff] %v376
      %381 = vst [vmem:[#allocation2 + $0x10] sm:$0xff] %v377
      %382 = vst [vmem:[#allocation2 + $0x18] sm:$0xff] %v378
    $region37: #{tpu_custom_call.1} parent=1 // pred_fallthru
      _
    // Predicated region
    $region38: #{tpu_custom_call.1} parent=1 // pred_check
      %p383 = pneg %p73
    $region39: #{tpu_custom_call.1} parent=1 // pred_check_branch
      %385 = sbr.rel (%p383) target = $region41
    $region40: #{tpu_custom_call.1} parent=1 // pred_region
      %v386 = vld [vmem:[#allocation2] sm:$0xff]
      %v387 = vld [vmem:[#allocation2 + $0x8] sm:$0xff]
      %v388 = vld [vmem:[#allocation2 + $0x10] sm:$0xff]
      %v389 = vld [vmem:[#allocation2 + $0x18] sm:$0xff]
      %v390 = vadd.f32 %v386, %v387
      %v391 = vadd.f32 %v390, %v388
      %v392 = vadd.f32 %v391, %v389
      %393 = vadd.xlane.f32.xlu0 %v392
      %v394 = vpop.xlane.xlu0 %393
      %v395 = vrot.slane %v394, 4
      %v396 = vadd.f32 %v394, %v395
      %v397 = vrot.slane %v396, 2
      %v398 = vadd.f32 %v396, %v397
      %v399 = vrot.slane %v398, 1
      %v400 = vadd.f32 %v398, %v399
      %s401 = vtos %v400
      %v402 = vstv %s401
      %v403 = vadd.f32 %v402, 0.0
      %404 = vst [vmem:[#allocation9] sm:$0xff] %v403
    $region41: #{tpu_custom_call.1} parent=1 // pred_fallthru
      _
    // Predicated region
    $region42: #{tpu_custom_call.1} parent=1 // pred_check
      _
    $region43: #{tpu_custom_call.1} parent=1 // pred_check_branch
      %406 = sbr.rel (0) target = $region45
    $region44: #{tpu_custom_call.1} parent=1 // pred_region
      %s408 = ssub.s32 128, 128
      %409 = vsyncadd [#allocation5], %s408
      %s411 = sshll.u32 [#allocation9], 4
      %s412 = int_to_ptr.vmem [resolvable:$true] %s411
      %414 = dma.vmem_to_hbm [thread:$0]  %s412, 128, %s3, [#allocation5]
    $region45: #{tpu_custom_call.1} parent=1 // pred_fallthru
      _
    // Predicated region
    $region46: #{tpu_custom_call.1} parent=1 // pred_check
      _
    $region47: #{tpu_custom_call.1} parent=1 // pred_check_branch
      %416 = sbr.rel (0) target = $region49
    $region48: #{tpu_custom_call.1} parent=1 // pred_region
      %417 = dma.done [#allocation5], 128
    $region49: #{tpu_custom_call.1} parent=1 // pred_fallthru
      _
    %418 = vsyncpa [#allocation4], 1
    %419 = vsyncpa [#allocation7], 1
    %420 = vsyncpa [#allocation5], 1

</llo_original>
